<compile_context>
chip_gen: v7x
topology: tpu7x:2x2x1
jax: 0.10.0
libtpu: 0.0.40
codegen_flags: <defaults>
</compile_context>

<pallas_src>
import jax
import jax.numpy as jnp
from jax.experimental import pallas as pl
from jax.experimental.pallas import tpu as pltpu


def attn_softmax_kernel(h_ref, enc_ref, mask_ref, out_ref):
    # h_ref: (B, H), enc_ref: (S, B, H), mask_ref: (B, S) int32, out_ref: (B, S)
    h = h_ref[...]                                  # (B, H)
    enc = enc_ref[...]                              # (S, B, H)

    # ---- dot score on the VPU: scores[s, b] = sum_h h[b, h] * enc[s, b, h] ----
    # (broadcast-mul + lane reduce over H; no MXU for an M=1 contraction)
    scores_sb = jnp.sum(h[None, :, :] * enc, axis=-1)   # (S, B)
    scores = scores_sb.T                                 # (B, S) — tiny XLU transpose

    # ---- masked softmax over S (matches masked_fill(-1e10) + softmax(dim=1)) ----
    scores = jnp.where(mask_ref[...] == 0, jnp.float32(-1e10), scores)   # (B, S)

    m = jnp.max(scores, axis=-1, keepdims=True)          # (B, 1)
    e = jnp.exp(scores - m)                               # (B, S)
    denom = jnp.sum(e, axis=-1, keepdims=True)            # (B, 1)
    out_ref[...] = e / denom                              # exact normalization


def luong_attention(hidden, encoder_outputs, mask):
    """hidden: (1, B, H); encoder_outputs: (S, B, H); mask: (B, S) -> weights (B, 1, S)."""
    _, B, H = hidden.shape
    S = encoder_outputs.shape[0]

    h_bh = hidden[0]                                       # (B, H), free squeeze in wrapper

    vmem = pl.BlockSpec(memory_space=pltpu.MemorySpace.VMEM)
    weights = pl.pallas_call(
        attn_softmax_kernel,
        out_shape=jax.ShapeDtypeStruct((B, S), jnp.float32),
        in_specs=[vmem, vmem, vmem],
        out_specs=vmem,
    )(h_bh, encoder_outputs, mask)

    return weights[:, None, :]                             # (B, 1, S), free reshape


# Single compiled XLA program per call (squeeze + pallas_call + reshape fused by XLA).
luong_attention = jax.jit(luong_attention)


def reference(hidden, encoder_outputs, mask):
    """Pure-JAX mirror of block_2.forward."""
    scores = jnp.sum(hidden * encoder_outputs, axis=2)          # (S, B)
    scores = scores.T                                           # (B, S)
    scores = jnp.where(mask == 0, jnp.float32(-1e10), scores)
    return jax.nn.softmax(scores, axis=1)[:, None, :]           # (B, 1, S)


if __name__ == "__main__":
    B, S, H = 2, 8, 32

    key = jax.random.PRNGKey(0)
    k1, k2 = jax.random.split(key)
    hidden = jax.random.normal(k1, (1, B, H), jnp.float32)           # (1, B, H)
    encoder_outputs = jax.random.normal(k2, (S, B, H), jnp.float32)  # (S, B, H)

    # mask: valid lengths per batch element (second sequence half-padded)
    lens = jnp.array([S, S // 2], dtype=jnp.int32)
    mask = (jnp.arange(S)[None, :] < lens[:, None]).astype(jnp.int32)  # (B, S)

    out = luong_attention(hidden, encoder_outputs, mask)
    out = jax.block_until_ready(out)

    ref = reference(hidden, encoder_outputs, mask)
    assert out.shape == (B, 1, S)
    assert jnp.allclose(out, ref, atol=1e-4, rtol=1e-4)
    # attention weights are a proper distribution over S
    assert jnp.allclose(jnp.sum(out, axis=-1), 1.0, atol=1e-4)
    # masked positions get (numerically) zero weight
    assert jnp.all(out[1, 0, S // 2:] < 1e-6)

    print("KERNEL_OK")
</pallas_src>

<mosaic_0001>
module attributes {stable_mosaic.version = 11 : i64} {
  func.func @attn_softmax_kernel(%arg0: memref<2x32xf32, #tpu.memory_space<vmem>>, %arg1: memref<8x2x32xf32, #tpu.memory_space<vmem>>, %arg2: memref<2x8xi32, #tpu.memory_space<vmem>>, %arg3: memref<2x8xf32, #tpu.memory_space<vmem>>) attributes {dimension_semantics = [], scalar_prefetch = 0 : i64, scratch_operands = 0 : i64, tpu.core_type = #tpu.core_type<tc>} {
    %c0 = arith.constant 0 : index
    %c0_0 = arith.constant 0 : index
    %0 = vector.load %arg0[%c0, %c0_0] : memref<2x32xf32, #tpu.memory_space<vmem>>, vector<2x32xf32>
    %c0_1 = arith.constant 0 : index
    %c0_2 = arith.constant 0 : index
    %c0_3 = arith.constant 0 : index
    %1 = vector.load %arg1[%c0_1, %c0_2, %c0_3] : memref<8x2x32xf32, #tpu.memory_space<vmem>>, vector<8x2x32xf32>
    %2 = vector.shape_cast %0 : vector<2x32xf32> to vector<1x2x32xf32>
    %3 = vector.broadcast %2 : vector<1x2x32xf32> to vector<8x2x32xf32>
    %4 = arith.mulf %3, %1 : vector<8x2x32xf32>
    %cst = arith.constant dense<0.000000e+00> : vector<8x2xf32>
    %5 = vector.multi_reduction <add>, %4, %cst [2] : vector<8x2x32xf32> to vector<8x2xf32>
    %6 = tpu.transpose %5, [1, 0] : vector<8x2xf32> -> vector<2x8xf32>
    %c0_4 = arith.constant 0 : index
    %c0_5 = arith.constant 0 : index
    %7 = vector.load %arg2[%c0_4, %c0_5] : memref<2x8xi32, #tpu.memory_space<vmem>>, vector<2x8xi32>
    %c0_i32 = arith.constant 0 : i32
    %8 = vector.broadcast %c0_i32 : i32 to vector<2x8xi32>
    %9 = arith.cmpi eq, %7, %8 : vector<2x8xi32>
    %cst_6 = arith.constant -1.000000e+10 : f32
    %10 = vector.broadcast %cst_6 : f32 to vector<2x8xf32>
    %11 = arith.select %9, %10, %6 : vector<2x8xi1>, vector<2x8xf32>
    %cst_7 = arith.constant dense<0xFF800000> : vector<2xf32>
    %12 = vector.multi_reduction <maximumf>, %11, %cst_7 [1] : vector<2x8xf32> to vector<2xf32>
    %13 = vector.shape_cast %12 : vector<2xf32> to vector<2x1xf32>
    %14 = vector.broadcast %13 : vector<2x1xf32> to vector<2x8xf32>
    %15 = arith.subf %11, %14 : vector<2x8xf32>
    %16 = math.exp %15 : vector<2x8xf32>
    %cst_8 = arith.constant dense<0.000000e+00> : vector<2xf32>
    %17 = vector.multi_reduction <add>, %16, %cst_8 [1] : vector<2x8xf32> to vector<2xf32>
    %18 = vector.shape_cast %17 : vector<2xf32> to vector<2x1xf32>
    %19 = vector.broadcast %18 : vector<2x1xf32> to vector<2x8xf32>
    %20 = arith.divf %16, %19 : vector<2x8xf32>
    %c0_9 = arith.constant 0 : index
    %c0_10 = arith.constant 0 : index
    %21 = vector.load %arg3[%c0_9, %c0_10] : memref<2x8xf32, #tpu.memory_space<vmem>>, vector<2x8xf32>
    tpu.vector_store %arg3[%c0_9, %c0_10], %20 {strides = array<i32>} : memref<2x8xf32, #tpu.memory_space<vmem>>, vector<2x8xf32>,
    return
  }
}

</mosaic_0001>

<llo_original>
// kernel: luong_attention.1
$region0: #{luong_attention.1}
  #allocation0 [shape = 'u32[]', space=smem, size = 0x4, offset = 0x4, fixed_abs, tag = 'smem constant byte address 0x4 - core index']
  #allocation1 [shape = 'u32[144,128]{1,0:T(1,128)}', space=vmem, size = 0x12000, scoped, tag = 'internal scratch']
  %s0 = inlined_call_operand.vmem [shape: f32[2,32], index: 0, kind: input, shape index: {}]
  %s1 = inlined_call_operand.hbm [shape: f32[8,2,32], index: 1, kind: input, shape index: {}]
  %s2 = inlined_call_operand.vmem [shape: s32[2,8], index: 2, kind: input, shape index: {}]
  %s3 = inlined_call_operand.hbm [shape: f32[2,8], index: 3, kind: output, shape index: {}]
  %s4 = sld [smem:[#allocation0]]
  $region26: #{luong_attention.1} parent=0
    _
  %s6 = ssub.s32 1, %s4
  %s7 = scalar_select 0, %s6, %s4
  $region1: #{luong_attention.1} parent=0
    #allocation2 [shape = 'u8[8192]{0}', space=vmem, size = 0x2000, scoped, tag = 'input window, operand 1, single buffered']
    #allocation3 [shape = 's32[1]{0}', space=sflag, size = 0x4, scoped, tag = 'scoped memory for luong_attention.1']
    #allocation4 [shape = 's32[1]{0}', space=sflag, size = 0x4, scoped, tag = 'scoped memory for luong_attention.1']
    #allocation5 [shape = 'u8[1024]{0}', space=vmem, size = 0x400, scoped, tag = 'output window, operand 0, single buffered']
    %8 = vsyncpa [#allocation3], 0
    %9 = vsyncpa [#allocation4], 0
    // Predicated region
    $region2: #{luong_attention.1} parent=1 // pred_check
      _
    $region3: #{luong_attention.1} parent=1 // pred_check_branch
      %11 = sbr.rel (0) target = $region5
    $region4: #{luong_attention.1} parent=1 // pred_region
      _
    $region5: #{luong_attention.1} parent=1 // pred_fallthru
      _
    // Predicated region
    $region6: #{luong_attention.1} parent=1 // pred_check
      _
    $region7: #{luong_attention.1} parent=1 // pred_check_branch
      %13 = sbr.rel (0) target = $region9
    $region8: #{luong_attention.1} parent=1 // pred_region
      %s15 = ssub.s32 256, 256
      %16 = vsyncadd [#allocation3], %s15
      %s17 = sshll.u32 [#allocation2], 4
      %s18 = int_to_ptr.vmem [resolvable:$true] %s17
      %23 = dma.hbm_to_vmem [thread:$0]  %s1, 256, %s18, [#allocation3], 32, 32, 2
    $region9: #{luong_attention.1} parent=1 // pred_fallthru
      _
    // Predicated region
    $region10: #{luong_attention.1} parent=1 // pred_check
      _
    $region11: #{luong_attention.1} parent=1 // pred_check_branch
      %25 = sbr.rel (0) target = $region13
    $region12: #{luong_attention.1} parent=1 // pred_region
      _
    $region13: #{luong_attention.1} parent=1 // pred_fallthru
      _
    // Predicated region
    $region14: #{luong_attention.1} parent=1 // pred_check
      _
    $region15: #{luong_attention.1} parent=1 // pred_check_branch
      %27 = sbr.rel (0) target = $region17
    $region16: #{luong_attention.1} parent=1 // pred_region
      %28 = dma.done [#allocation3], 256
    $region17: #{luong_attention.1} parent=1 // pred_fallthru
      _
    %v29 = vld [vmem:[%s0] sm:$0x3]
    %v30 = vld [vmem:[#allocation2] sm:$0x3]
    %v31 = vld [vmem:[#allocation2 + $0x2] sm:$0x3]
    %v32 = vld [vmem:[#allocation2 + $0x4] sm:$0x3]
    %v33 = vld [vmem:[#allocation2 + $0x6] sm:$0x3]
    %v34 = vld [vmem:[#allocation2 + $0x8] sm:$0x3]
    %v35 = vld [vmem:[#allocation2 + $0xa] sm:$0x3]
    %v36 = vld [vmem:[#allocation2 + $0xc] sm:$0x3]
    %v37 = vld [vmem:[#allocation2 + $0xe] sm:$0x3]
    %v38 = vmul.f32 %v29, %v30
    %v39 = vmul.f32 %v29, %v31
    %v40 = vmul.f32 %v29, %v32
    %v41 = vmul.f32 %v29, %v33
    %v42 = vmul.f32 %v29, %v34
    %v43 = vmul.f32 %v29, %v35
    %v44 = vmul.f32 %v29, %v36
    %v45 = vmul.f32 %v29, %v37
    %vm46 = vcmask 254976
    %v47 = vsel %vm46, %v38, 0.0
    %48 = vadd.xlane.f32.xlu0 %v47
    %v49 = vpop.xlane.xlu0 %48
    %v50 = vsel %vm46, %v39, 0.0
    %51 = vadd.xlane.f32.xlu0 %v50
    %v52 = vpop.xlane.xlu0 %51
    %v53 = vsel %vm46, %v40, 0.0
    %54 = vadd.xlane.f32.xlu0 %v53
    %v55 = vpop.xlane.xlu0 %54
    %v56 = vsel %vm46, %v41, 0.0
    %57 = vadd.xlane.f32.xlu0 %v56
    %v58 = vpop.xlane.xlu0 %57
    %v59 = vsel %vm46, %v42, 0.0
    %60 = vadd.xlane.f32.xlu0 %v59
    %v61 = vpop.xlane.xlu0 %60
    %v62 = vsel %vm46, %v43, 0.0
    %63 = vadd.xlane.f32.xlu0 %v62
    %v64 = vpop.xlane.xlu0 %63
    %v65 = vsel %vm46, %v44, 0.0
    %66 = vadd.xlane.f32.xlu0 %v65
    %v67 = vpop.xlane.xlu0 %66
    %v68 = vsel %vm46, %v45, 0.0
    %69 = vadd.xlane.f32.xlu0 %v68
    %v70 = vpop.xlane.xlu0 %69
    %v79 = vlaneseq
    %v80 = vand.u32 %v79, 127
    %v81 = vlaneseq
    %v82 = vshrl.u32 %v81, 7
    %v83 = vsub.s32 %v80, %v82
    %v84 = vrot.slane %v49, %v83
    %v85 = vlaneseq
    %v86 = vshrl.u32 %v85, 7
    %v87 = vsub.s32 %v80, %v86
    %v88 = vrot.slane %v52, %v87
    %v89 = vlaneseq
    %v90 = vshrl.u32 %v89, 7
    %v91 = vsub.s32 %v80, %v90
    %v92 = vrot.slane %v55, %v91
    %v93 = vlaneseq
    %v94 = vshrl.u32 %v93, 7
    %v95 = vsub.s32 %v80, %v94
    %v96 = vrot.slane %v58, %v95
    %v97 = vlaneseq
    %v98 = vshrl.u32 %v97, 7
    %v99 = vsub.s32 %v80, %v98
    %v100 = vrot.slane %v61, %v99
    %v101 = vlaneseq
    %v102 = vshrl.u32 %v101, 7
    %v103 = vsub.s32 %v80, %v102
    %v104 = vrot.slane %v64, %v103
    %v105 = vlaneseq
    %v106 = vshrl.u32 %v105, 7
    %v107 = vsub.s32 %v80, %v106
    %v108 = vrot.slane %v67, %v107
    %v109 = vlaneseq
    %v110 = vshrl.u32 %v109, 7
    %v111 = vsub.s32 %v80, %v110
    %v112 = vrot.slane %v70, %v111
    %vm113 = vcmask 1041409
    %v114 = vsel %vm113, %v88, %v84
    %vm115 = vcmask 1042434
    %v116 = vsel %vm115, %v92, %v114
    %vm117 = vcmask 1043459
    %v118 = vsel %vm117, %v96, %v116
    %vm119 = vcmask 1044484
    %v120 = vsel %vm119, %v100, %v118
    %vm121 = vcmask 1045509
    %v122 = vsel %vm121, %v104, %v120
    %vm123 = vcmask 1046534
    %v124 = vsel %vm123, %v108, %v122
    %vm125 = vcmask 1047559
    %v126 = vsel %vm125, %v112, %v124
    %128 = vxpose.xlu0.b32.start [1/16] %v126, 128
    %129 = vxpose.xlu0.b32.cont [2/16] 0.0, 128
    %130 = vxpose.xlu0.b32.cont [3/16] 0.0, 128
    %131 = vxpose.xlu0.b32.cont [4/16] 0.0, 128
    %132 = vxpose.xlu0.b32.cont [5/16] 0.0, 128
    %133 = vxpose.xlu0.b32.cont [6/16] 0.0, 128
    %134 = vxpose.xlu0.b32.cont [7/16] 0.0, 128
    %135 = vxpose.xlu0.b32.cont [8/16] 0.0, 128
    %136 = vxpose.xlu0.b32.cont [9/16] 0.0, 128
    %137 = vxpose.xlu0.b32.cont [10/16] 0.0, 128
    %138 = vxpose.xlu0.b32.cont [11/16] 0.0, 128
    %139 = vxpose.xlu0.b32.cont [12/16] 0.0, 128
    %140 = vxpose.xlu0.b32.cont [13/16] 0.0, 128
    %141 = vxpose.xlu0.b32.cont [14/16] 0.0, 128
    %142 = vxpose.xlu0.b32.cont [15/16] 0.0, 128
    %143 = vxpose.xlu0.b32.end [16/16] 0.0, 128
    %v144 = vpop.trf.xlu0
    %v145 = vpop.trf.xlu0
    %v146 = vpop.trf.xlu0
    %v147 = vpop.trf.xlu0
    %v148 = vpop.trf.xlu0
    %v149 = vpop.trf.xlu0
    %v150 = vpop.trf.xlu0
    %v151 = vpop.trf.xlu0
    %v152 = vpop.trf.xlu0
    %v153 = vpop.trf.xlu0
    %v154 = vpop.trf.xlu0
    %v155 = vpop.trf.xlu0
    %v156 = vpop.trf.xlu0
    %v157 = vpop.trf.xlu0
    %v158 = vpop.trf.xlu0
    %v159 = vpop.trf.xlu0
    %v160 = vld [vmem:[%s2] sm:$0x3]
    %vm161 = vcmp.eq.s32.totalorder %v160, 0
    %v162 = vsel %vm161, -1e+10, %v144
    %vm163 = vcmask 58368
    %v164 = vsel %vm163, %v162, -inf
    %165 = vmax.xlane.f32.xlu0 %v164
    %v166 = vpop.xlane.xlu0 %165
    %v167 = vsub.f32 %v162, %v166
    %v168 = vmul.f32 %v167, 1.442695
    %v169 = vpow.pop %v168
    %v170 = vsel %vm163, %v169, 0.0
    %171 = vadd.xlane.f32.xlu0 %v170
    %v172 = vpop.xlane.xlu0 %171
    %v173 = vrcp.pop %v172
    %v174 = vmul.f32 %v169, %v173
    %175 = vst.msk [vmem:[#allocation5] sm:$0x3] %vm163, %v174
    // Predicated region
    $region18: #{luong_attention.1} parent=1 // pred_check
      _
    $region19: #{luong_attention.1} parent=1 // pred_check_branch
      %177 = sbr.rel (0) target = $region21
    $region20: #{luong_attention.1} parent=1 // pred_region
      %s179 = ssub.s32 32, 32
      %180 = vsyncadd [#allocation4], %s179
      %s182 = sshll.u32 [#allocation5], 4
      %s183 = int_to_ptr.vmem [resolvable:$true] %s182
      %185 = dma.vmem_to_hbm [thread:$0]  %s183, 32, %s3, [#allocation4]
    $region21: #{luong_attention.1} parent=1 // pred_fallthru
      _
    // Predicated region
    $region22: #{luong_attention.1} parent=1 // pred_check
      _
    $region23: #{luong_attention.1} parent=1 // pred_check_branch
      %187 = sbr.rel (0) target = $region25
    $region24: #{luong_attention.1} parent=1 // pred_region
      %188 = dma.done [#allocation4], 32
    $region25: #{luong_attention.1} parent=1 // pred_fallthru
      _
    %189 = vsyncpa [#allocation3], 1
    %190 = vsyncpa [#allocation4], 1

</llo_original>
